<compile_context>
chip_gen: v7x
topology: tpu7x:2x2x1
jax: 0.10.0
libtpu: 0.0.40
codegen_flags: <defaults>
</compile_context>

<pallas_src>
import functools
import math

import jax
import jax.numpy as jnp
from jax.experimental import pallas as pl
from jax.experimental.pallas import tpu as pltpu


# ---------------------------------------------------------------------------
# Hardware-aware budgets
# ---------------------------------------------------------------------------

def _sublane_pack(dtype) -> int:
    """Sublane packing factor: 8 (f32), 16 (bf16), 32 (int8/fp8)."""
    return max(8, 32 // jnp.dtype(dtype).itemsize)


def _vmem_capacity_bytes() -> int:
    try:
        return int(pltpu.get_tpu_info().vmem_capacity_bytes)
    except Exception:  # off-TPU tracing / API drift: assume the small (v7x) VMEM
        return 64 * 1024 * 1024


def _tile_budget_bytes() -> int:
    """Per-buffer tile budget: ~8 MiB on 128 MiB-VMEM parts (v5e/v6e), ~4 MiB on v7x."""
    return (8 if _vmem_capacity_bytes() >= 100 * 1024 * 1024 else 4) * 1024 * 1024


def _vmem_limit_bytes(in_tile_bytes: int, out_tile_bytes: int) -> int:
    """Scoped-VMEM limit derived from the actual chosen (padded) tiles."""
    big_vmem = _vmem_capacity_bytes() >= 100 * 1024 * 1024
    ceiling = (64 if big_vmem else 48) * 1024 * 1024
    live = 2 * (in_tile_bytes + out_tile_bytes)        # double-buffered in + out
    live += 2 * max(in_tile_bytes, out_tile_bytes)     # in-kernel relayout temps
    limit = live + 8 * 1024 * 1024                      # compiler scratch headroom
    return int(min(max(limit, 32 * 1024 * 1024), ceiling))


def _padded2d_bytes(sub: int, lane: int, dtype) -> int:
    """VMEM footprint of a (sub, lane) tile after (pack, 128) padding."""
    pack = _sublane_pack(dtype)
    sub_p = -(-sub // pack) * pack
    lane_p = -(-lane // 128) * 128
    return sub_p * lane_p * jnp.dtype(dtype).itemsize


# ---------------------------------------------------------------------------
# Tile selection
# ---------------------------------------------------------------------------

def _aligned_divisors(dim: int, mult: int) -> list:
    """Divisors of `dim` that are multiples of `mult`, plus `dim` itself
    (a full-extent block is always legal)."""
    out = {dim}
    if dim % mult == 0:
        for k in range(1, dim // mult + 1):
            t = k * mult
            if dim % t == 0:
                out.add(t)
    return sorted(out)


def _ensure_two_steps(B, C, H, tc, th, tcs, ths):
    """v7x shards all-'parallel' grids across 2 TensorCores; make sure the grid
    has at least 2 steps (harmless no-op on single-TC v5e/v6e)."""
    if B * (H // th) * (C // tc) >= 2:
        return tc, th
    smaller_th = [t for t in ths if t < th]
    smaller_tc = [t for t in tcs if t < tc]
    if H >= C and smaller_th:
        return tc, max(smaller_th)
    if smaller_tc:
        return max(smaller_tc), th
    if smaller_th:
        return tc, max(smaller_th)
    return tc, th


def _greedy_pick(B, C, H, tcs, ths, tile_bytes_fn, budget):
    """Greedy: prefer th == H (contiguous input strips), else maximize tile size."""
    best = None
    for th in ths:
        fitting = [tc for tc in tcs if tile_bytes_fn(tc, th) <= budget]
        if not fitting:
            continue
        tc = max(fitting)
        key = (th == H, tc * th, th)
        if best is None or key > best[0]:
            best = (key, tc, th)
    if best is None:
        return None
    tc, th = best[1], best[2]
    return _ensure_two_steps(B, C, H, tc, th, tcs, ths)


def _pick_tiles_folded(B, C, H, W, dtype, budget):
    """Tiles for the lane-folded kernel; returns None if constraints can't be met."""
    pack = _sublane_pack(dtype)
    lane_mult = 128 // math.gcd(W, 128)          # t*W % 128 == 0  <=>  t % lane_mult == 0
    mult = pack * lane_mult // math.gcd(pack, lane_mult)   # lcm(pack, lane_mult)
    tcs = _aligned_divisors(C, mult)
    ths = _aligned_divisors(H, mult)

    def tile_bytes(tc, th):
        return max(_padded2d_bytes(tc, th * W, dtype),
                   _padded2d_bytes(th, tc * W, dtype))

    return _greedy_pick(B, C, H, tcs, ths, tile_bytes, budget)


def _pick_tiles_4d(B, C, H, W, dtype, budget):
    """Tiles for the plain 4-D kernel (always legal; falls back to full dims)."""
    pack = _sublane_pack(dtype)
    w_pad_bytes = (-(-W // 128) * 128) * jnp.dtype(dtype).itemsize
    tcs = _aligned_divisors(C, pack)
    ths = _aligned_divisors(H, pack)

    def tile_bytes(tc, th):
        th_p = -(-th // pack) * pack
        tc_p = -(-tc // pack) * pack
        return max(tc * th_p, th * tc_p) * w_pad_bytes

    picked = _greedy_pick(B, C, H, tcs, ths, tile_bytes, budget)
    if picked is None:  # nothing under budget: smallest legal tile
        picked = _ensure_two_steps(B, C, H, min(tcs), min(ths), tcs, ths)
    return picked


# ---------------------------------------------------------------------------
# Kernels
# ---------------------------------------------------------------------------

def _folded_kernel(x_ref, o_ref, *, tc, th, W):
    # x_ref block: (1, tc, th*W)  ->  o_ref block: (1, th, tc*W)
    # In-kernel relayout (lands on shuffle/XLU units, idle in this copy).
    x = x_ref[...].reshape(tc, th, W)
    o_ref[...] = jnp.swapaxes(x, 0, 1).reshape(1, th, tc * W)


def _swap_kernel_4d(x_ref, o_ref):
    # x_ref block: (1, tc, th, W)  ->  o_ref block: (1, th, tc, W)
    o_ref[...] = jnp.swapaxes(x_ref[...], 1, 2)


# ---------------------------------------------------------------------------
# Dispatchers
# ---------------------------------------------------------------------------

def _swap_folded(x, tc, th):
    B, C, H, W = x.shape
    nbytes = x.size * jnp.dtype(x.dtype).itemsize
    x_f = x.reshape(B, C, H * W)                      # free: collapse trailing dims
    in_tile = _padded2d_bytes(tc, th * W, x.dtype)
    out_tile = _padded2d_bytes(th, tc * W, x.dtype)
    kernel = functools.partial(_folded_kernel, tc=tc, th=th, W=W)
    out_f = pl.pallas_call(
        kernel,
        out_shape=jax.ShapeDtypeStruct((B, H, C * W), x.dtype),
        grid_spec=pl.GridSpec(
            grid=(B, H // th, C // tc),
            in_specs=[pl.BlockSpec((1, tc, th * W), lambda b, h, c: (b, c, h))],
            out_specs=pl.BlockSpec((1, th, tc * W), lambda b, h, c: (b, h, c)),
        ),
        compiler_params=pltpu.CompilerParams(
            dimension_semantics=("parallel", "parallel", "parallel"),
            vmem_limit_bytes=_vmem_limit_bytes(in_tile, out_tile),
        ),
        cost_estimate=pl.CostEstimate(
            flops=0, transcendentals=0, bytes_accessed=2 * nbytes),
    )(x_f)
    return out_f.reshape(B, H, C, W)                  # free: split trailing dim


def _swap_4d(x, tc, th):
    B, C, H, W = x.shape
    pack = _sublane_pack(x.dtype)
    it = jnp.dtype(x.dtype).itemsize
    nbytes = x.size * it
    w_pad = -(-W // 128) * 128
    in_tile = tc * (-(-th // pack) * pack) * w_pad * it
    out_tile = th * (-(-tc // pack) * pack) * w_pad * it
    return pl.pallas_call(
        _swap_kernel_4d,
        out_shape=jax.ShapeDtypeStruct((B, H, C, W), x.dtype),
        grid_spec=pl.GridSpec(
            grid=(B, H // th, C // tc),
            in_specs=[pl.BlockSpec((1, tc, th, W), lambda b, h, c: (b, c, h, 0))],
            out_specs=pl.BlockSpec((1, th, tc, W), lambda b, h, c: (b, h, c, 0)),
        ),
        compiler_params=pltpu.CompilerParams(
            dimension_semantics=("parallel", "parallel", "parallel"),
            vmem_limit_bytes=_vmem_limit_bytes(in_tile, out_tile),
        ),
        cost_estimate=pl.CostEstimate(
            flops=0, transcendentals=0, bytes_accessed=2 * nbytes),
    )(x)


def swap_layer(x, *, min_pallas_bytes: int = 256 * 1024):
    """Pallas equivalent of torch `x.transpose(1, 2)` for a 4D (B, C, H, W) tensor.

    `min_pallas_bytes`: inputs smaller than this bypass the kernel entirely
    (fixed launch + per-step overhead dominates tiny tensors).
    """
    B, C, H, W = x.shape
    nbytes = x.size * jnp.dtype(x.dtype).itemsize

    if nbytes < min_pallas_bytes:
        return jnp.swapaxes(x, 1, 2)

    budget = _tile_budget_bytes()

    if W % 128 != 0:
        picked = _pick_tiles_folded(B, C, H, W, x.dtype, budget)
        if picked is not None:
            try:
                return _swap_folded(x, *picked)
            except Exception:
                # Safety net: if the in-kernel relayout fails to lower on some
                # backend/version, fall back to the (verified) 4-D path.
                pass

    tc, th = _pick_tiles_4d(B, C, H, W, x.dtype, budget)
    return _swap_4d(x, tc, th)


# ---------------------------------------------------------------------------
# Self-test
# ---------------------------------------------------------------------------

if __name__ == "__main__":
    k0, k1, k2 = jax.random.split(jax.random.PRNGKey(0), 3)

    # 1) Spec shape (B, C, H, W) = (2, 4, 16, 16): small-input bypass path.
    x = jax.random.normal(k0, (2, 4, 16, 16), dtype=jnp.float32)
    ref = jnp.swapaxes(x, 1, 2)
    out = jax.block_until_ready(swap_layer(x))
    assert out.shape == (2, 16, 4, 16) and out.dtype == x.dtype
    assert jnp.array_equal(out, ref), "mismatch (bypass path)"

    # 2) Same spec shape forced through the Pallas kernel (lane-folded, W=16).
    out_forced = jax.block_until_ready(swap_layer(x, min_pallas_bytes=0))
    assert out_forced.shape == (2, 16, 4, 16)
    assert jnp.array_equal(out_forced, ref), "mismatch (folded path, spec shape)"

    # 3) Larger small-W feature map: exercises folded tiling with aligned tiles.
    x3 = jax.random.normal(k1, (2, 64, 48, 32), dtype=jnp.float32)
    out3 = jax.block_until_ready(swap_layer(x3, min_pallas_bytes=0))
    assert out3.shape == (2, 48, 64, 32)
    assert jnp.array_equal(out3, jnp.swapaxes(x3, 1, 2)), "mismatch (folded, tiled)"

    # 4) Lane-aligned W: plain 4-D path with swapped index maps.
    x4 = jax.random.normal(k2, (2, 16, 32, 256), dtype=jnp.float32)
    out4 = jax.block_until_ready(swap_layer(x4, min_pallas_bytes=0))
    assert out4.shape == (2, 32, 16, 256)
    assert jnp.array_equal(out4, jnp.swapaxes(x4, 1, 2)), "mismatch (4-D path)"

    print("KERNEL_OK")
</pallas_src>

<mosaic_0001>
module attributes {stable_mosaic.version = 11 : i64} {
  func.func @_folded_kernel(%arg0: i32, %arg1: i32, %arg2: i32, %arg3: memref<1x4x256xf32, #tpu.memory_space<vmem>>, %arg4: memref<1x16x64xf32, #tpu.memory_space<vmem>>) attributes {dimension_semantics = [#tpu.dimension_semantics<parallel>, #tpu.dimension_semantics<parallel>, #tpu.dimension_semantics<parallel>], iteration_bounds = array<i64: 2, 1, 1>, scalar_prefetch = 0 : i64, scratch_operands = 0 : i64, tpu.core_type = #tpu.core_type<tc>, window_params = [{transform_indices = @transform_0, window_bounds = array<i64: 1, 4, 256>}, {transform_indices = @transform_1, window_bounds = array<i64: 1, 16, 64>}]} {
    %c0 = arith.constant 0 : index
    %c0_0 = arith.constant 0 : index
    %c0_1 = arith.constant 0 : index
    %0 = vector.load %arg3[%c0, %c0_0, %c0_1] : memref<1x4x256xf32, #tpu.memory_space<vmem>>, vector<1x4x256xf32>
    %1 = vector.shape_cast %0 : vector<1x4x256xf32> to vector<4x16x16xf32>
    %2 = tpu.transpose %1, [1, 0, 2] : vector<4x16x16xf32> -> vector<16x4x16xf32>
    %3 = vector.shape_cast %2 : vector<16x4x16xf32> to vector<1x16x64xf32>
    %c0_2 = arith.constant 0 : index
    %c0_3 = arith.constant 0 : index
    %c0_4 = arith.constant 0 : index
    %4 = vector.load %arg4[%c0_2, %c0_3, %c0_4] : memref<1x16x64xf32, #tpu.memory_space<vmem>>, vector<1x16x64xf32>
    tpu.vector_store %arg4[%c0_2, %c0_3, %c0_4], %3 {strides = array<i32>} : memref<1x16x64xf32, #tpu.memory_space<vmem>>, vector<1x16x64xf32>,
    return
  }
  func.func @transform_0(%arg0: i32, %arg1: i32, %arg2: i32) -> (i32, i32, i32) {
    %c0_i32 = arith.constant 0 : i32
    return %arg0, %arg2, %arg1 : i32, i32, i32
  }
  func.func @transform_1(%arg0: i32, %arg1: i32, %arg2: i32) -> (i32, i32, i32) {
    %c0_i32 = arith.constant 0 : i32
    return %arg0, %arg1, %arg2 : i32, i32, i32
  }
}

module attributes {stable_mosaic.version = 11 : i64} {
  func.func @_swap_kernel_4d(%arg0: i32, %arg1: i32, %arg2: i32, %arg3: memref<1x4x16x16xf32, #tpu.memory_space<vmem>>, %arg4: memref<1x16x4x16xf32, #tpu.memory_space<vmem>>) attributes {dimension_semantics = [#tpu.dimension_semantics<parallel>, #tpu.dimension_semantics<parallel>, #tpu.dimension_semantics<parallel>], iteration_bounds = array<i64: 2, 1, 1>, scalar_prefetch = 0 : i64, scratch_operands = 0 : i64, tpu.core_type = #tpu.core_type<tc>, window_params = [{transform_indices = @transform_0, window_bounds = array<i64: 1, 4, 16, 16>}, {transform_indices = @transform_1, window_bounds = array<i64: 1, 16, 4, 16>}]} {
    %c0 = arith.constant 0 : index
    %c0_0 = arith.constant 0 : index
    %c0_1 = arith.constant 0 : index
    %c0_2 = arith.constant 0 : index
    %0 = vector.load %arg3[%c0, %c0_0, %c0_1, %c0_2] : memref<1x4x16x16xf32, #tpu.memory_space<vmem>>, vector<1x4x16x16xf32>
    %1 = tpu.transpose %0, [0, 2, 1, 3] : vector<1x4x16x16xf32> -> vector<1x16x4x16xf32>
    %c0_3 = arith.constant 0 : index
    %c0_4 = arith.constant 0 : index
    %c0_5 = arith.constant 0 : index
    %c0_6 = arith.constant 0 : index
    %2 = vector.load %arg4[%c0_3, %c0_4, %c0_5, %c0_6] : memref<1x16x4x16xf32, #tpu.memory_space<vmem>>, vector<1x16x4x16xf32>
    tpu.vector_store %arg4[%c0_3, %c0_4, %c0_5, %c0_6], %1 {strides = array<i32>} : memref<1x16x4x16xf32, #tpu.memory_space<vmem>>, vector<1x16x4x16xf32>,
    return
  }
  func.func @transform_0(%arg0: i32, %arg1: i32, %arg2: i32) -> (i32, i32, i32, i32) {
    %c0_i32 = arith.constant 0 : i32
    %c0_i32_0 = arith.constant 0 : i32
    return %arg0, %arg2, %arg1, %c0_i32 : i32, i32, i32, i32
  }
  func.func @transform_1(%arg0: i32, %arg1: i32, %arg2: i32) -> (i32, i32, i32, i32) {
    %c0_i32 = arith.constant 0 : i32
    %c0_i32_0 = arith.constant 0 : i32
    return %arg0, %arg1, %arg2, %c0_i32 : i32, i32, i32, i32
  }
}

</mosaic_0001>

<llo_original>
// kernel: tpu_custom_call.1
$region0: #{tpu_custom_call.1}
  #allocation0 [shape = 'u32[]', space=smem, size = 0x4, offset = 0x4, fixed_abs, tag = 'smem constant byte address 0x4 - core index']
  #allocation1 [shape = 'u32[144,128]{1,0:T(1,128)}', space=vmem, size = 0x12000, scoped, tag = 'internal scratch']
  %s0 = inlined_call_operand.hbm [shape: f32[2,4,256], index: 0, kind: input, shape index: {}]
  %s1 = inlined_call_operand.hbm [shape: f32[2,16,64], index: 1, kind: output, shape index: {}]
  %s2 = sld [smem:[#allocation0]]
  $region41: #{tpu_custom_call.1} parent=0
    _
  %s4 = ssub.s32 1, %s2
  %s5 = scalar_select 0, %s4, %s2
  $region1: #{tpu_custom_call.1} parent=0
    #allocation2 [shape = 'u8[8192]{0}', space=vmem, size = 0x2000, scoped, tag = 'input window, operand 0']
    #allocation3 [shape = 's32[2]{0}', space=sflag, size = 0x8, scoped, tag = 'scoped memory for tpu_custom_call.1']
    #allocation4 [shape = 's32[2]{0}', space=sflag, size = 0x8, scoped, tag = 'scoped memory for tpu_custom_call.1']
    #allocation5 [shape = 'u8[16384]{0}', space=vmem, size = 0x4000, scoped, tag = 'output window, operand 0']
    %6 = vsyncpa [#allocation3], 0
    %s7 = scalar_lea.sflag [#allocation3], 1
    %8 = vsyncpa %s7, 0
    %9 = vsyncpa [#allocation4], 0
    %s10 = scalar_lea.sflag [#allocation4], 1
    %11 = vsyncpa %s10, 0
    loop: start=0, step=1, limit=4
    $region2: #{tpu_custom_call.1} parent=1 // loop_pre_header
      _
    $region3: #{tpu_custom_call.1} parent=1 // loop_header
      %s13 = sphi 0, %s17
      %p14 = scmp.ge.s32.totalorder %s13, 4
      %s20 = sphi 0, %s39
      %s21 = sphi 0, %s35
      %s22 = sphi 0, %s31
      %s23 = sphi 0, %s20
      %s24 = sphi 0, %s21
      %s25 = sphi 0, %s22
      %s26 = sphi 0, %s23
      %s27 = sphi 0, %s24
      %s28 = sphi 0, %s25
      %s46 = sphi 0, %s48
      %s49 = sphi 0, %s46
      %s50 = sphi 0, %s49
      %s66 = sphi 0, %s50
      %s76 = sphi 0, %s78
      %s79 = sphi 0, %s76
      %s80 = sphi 0, %s79
      %s96 = sphi 0, %s80
    $region4: #{tpu_custom_call.1} parent=1 // loop_header_branch
      %16 = sbr.rel (%p14) target = $region8
    $region5: #{tpu_custom_call.1} parent=1 // loop_body
      %s18 = ssub.s32 %s13, 1
      %s19 = ssub.s32 %s13, 2
      %s29 = sadd.s32 1, %s22
      %p30 = scmp.ge.s32.totalorder %s29, 1
      %s31 = scalar_select %p30, 0, %s29
      %s32 = sadd.s32 1, %s21
      %s33 = scalar_select %p30, %s32, %s21
      %p34 = scmp.ge.s32.totalorder %s33, 1
      %s35 = scalar_select %p34, 0, %s33
      %s36 = sadd.s32 1, %s20
      %s37 = scalar_select %p34, %s36, %s20
      %p38 = scmp.ge.s32.totalorder %s37, 2
      %s39 = scalar_select %p38, 0, %s37
      %s40 = ssub.s32 %s20, %s39
      %s41 = ssub.s32 %s22, %s31
      %s42 = sor.u32 %s40, %s41
      %s43 = ssub.s32 %s21, %s35
      %s44 = sor.u32 %s42, %s43
      %p45 = scmp.eq.s32.totalorder %s44, 0
      %s47 = sadd.s32 %s46, 1
      %s48 = scalar_select %p45, %s46, %s47
      %p51 = pneg %p45
      %p52 = scmp.eq.s32.totalorder %s13, 1
      %p53 = por %p51, %p52
      %p54 = scmp.ne.s32.totalorder %s46, %s49
      %p55 = scmp.eq.s32.totalorder %s13, 0
      %p56 = por %p54, %p55
      %p57 = scmp.ne.s32.totalorder %s46, %s49
      %p58 = scmp.eq.s32.totalorder %s18, 1
      %p59 = por %p57, %p58
      %p60 = scmp.ne.s32.totalorder %s49, %s50
      %p61 = scmp.eq.s32.totalorder %s18, 0
      %p62 = por %p60, %p61
      %p63 = scmp.ne.s32.totalorder %s49, %s50
      %p64 = scmp.eq.s32.totalorder %s19, 1
      %p65 = por %p63, %p64
      %p67 = scmp.ne.s32.totalorder %s50, %s66
      %p68 = scmp.eq.s32.totalorder %s19, 0
      %p69 = por %p67, %p68
      %s70 = ssub.s32 %s20, %s39
      %s71 = ssub.s32 %s21, %s35
      %s72 = sor.u32 %s70, %s71
      %s73 = ssub.s32 %s22, %s31
      %s74 = sor.u32 %s72, %s73
      %p75 = scmp.eq.s32.totalorder %s74, 0
      %s77 = sadd.s32 %s76, 1
      %s78 = scalar_select %p75, %s76, %s77
      %p81 = pneg %p75
      %p82 = scmp.eq.s32.totalorder %s13, 1
      %p83 = por %p81, %p82
      %p84 = scmp.ne.s32.totalorder %s76, %s79
      %p85 = scmp.eq.s32.totalorder %s13, 0
      %p86 = por %p84, %p85
      %p87 = scmp.ne.s32.totalorder %s76, %s79
      %p88 = scmp.eq.s32.totalorder %s18, 1
      %p89 = por %p87, %p88
      %p90 = scmp.ne.s32.totalorder %s79, %s80
      %p91 = scmp.eq.s32.totalorder %s18, 0
      %p92 = por %p90, %p91
      %p93 = scmp.ne.s32.totalorder %s79, %s80
      %p94 = scmp.eq.s32.totalorder %s19, 1
      %p95 = por %p93, %p94
      %p97 = scmp.ne.s32.totalorder %s80, %s96
      %p98 = scmp.eq.s32.totalorder %s19, 0
      %p99 = por %p97, %p98
      %p100 = scmp.le.s32.totalorder 1, %s13
      %p101 = scmp.lt.s32.totalorder %s13, 3
      %p102 = pnand %p100, %p101
      %p103 = pneg %p102
      // Predicated region
      $region9: #{tpu_custom_call.1} parent=5 // pred_check
        _
      $region10: #{tpu_custom_call.1} parent=5 // pred_check_branch
        %105 = sbr.rel (%p102) target = $region12
      $region11: #{tpu_custom_call.1} parent=5 // pred_region
        %s106 = ssub.s32 %s13, 1
      $region12: #{tpu_custom_call.1} parent=5 // pred_fallthru
        _
      %p107 = scmp.lt.s32.totalorder %s13, 2
      // Predicated region
      $region13: #{tpu_custom_call.1} parent=5 // pred_check
        %p108 = pneg %p107
      $region14: #{tpu_custom_call.1} parent=5 // pred_check_branch
        %110 = sbr.rel (%p108) target = $region16
      $region15: #{tpu_custom_call.1} parent=5 // pred_region
        // Predicated region
        $region17: #{tpu_custom_call.1} parent=15 // pred_check
          %p111 = pneg %p56
        $region18: #{tpu_custom_call.1} parent=15 // pred_check_branch
          %113 = sbr.rel (%p111) target = $region20
        $region19: #{tpu_custom_call.1} parent=15 // pred_region
          %s114 = sand.u32 %s46, 1
          %s115 = scalar_lea.sflag [#allocation3], %s114
          %s116 = sand.u32 %s46, 1
          %s117 = smul.addr %s116, 8
          %s118 = scalar_lea.vmem [#allocation2], %s117
          %s119 = smul.u32 2, %s21
          %s121 = ssub.s32 128, 128
          %122 = vsyncadd %s115, %s121
          %s123 = smul.addr %s22, 2
          %s124 = sadd.s32 %s119, %s123
          %s125 = smul.addr %s20, 2
          %s126 = sadd.s32 %s124, %s125
          %s127 = smul.addr %s126, 64
          %s128 = scalar_lea.hbm %s0, %s127
          %s130 = sshll.u32 %s118, 4
          %s131 = int_to_ptr.vmem [resolvable:$true] %s130
          %133 = dma.hbm_to_vmem [thread:$0]  %s128, 128, %s131, %s115
        $region20: #{tpu_custom_call.1} parent=15 // pred_fallthru
          _
      $region16: #{tpu_custom_call.1} parent=5 // pred_fallthru
        _
      %p134 = scmp.le.s32.totalorder 1, %s13
      %p135 = scmp.lt.s32.totalorder %s13, 3
      %p136 = pnand %p134, %p135
      %p137 = pneg %p136
      // Predicated region
      $region21: #{tpu_custom_call.1} parent=5 // pred_check
        _
      $region22: #{tpu_custom_call.1} parent=5 // pred_check_branch
        %139 = sbr.rel (%p136) target = $region24
      $region23: #{tpu_custom_call.1} parent=5 // pred_region
        %s140 = ssub.s32 %s13, 1
        %s141 = sand.u32 %s49, 1
        %s142 = scalar_lea.sflag [#allocation3], %s141
        %s143 = sand.u32 %s49, 1
        %s144 = smul.addr %s143, 8
        %s145 = scalar_lea.vmem [#allocation2], %s144
        // Predicated region
        $region25: #{tpu_custom_call.1} parent=23 // pred_check
          %p146 = pneg %p62
        $region26: #{tpu_custom_call.1} parent=23 // pred_check_branch
          %148 = sbr.rel (%p146) target = $region28
        $region27: #{tpu_custom_call.1} parent=23 // pred_region
          %149 = dma.done %s142, 128
        $region28: #{tpu_custom_call.1} parent=23 // pred_fallthru
          _
        %s150 = sand.u32 %s49, 1
        %s151 = scalar_lea.sflag [#allocation3], %s150
        %s152 = sand.u32 %s49, 1
        %s153 = smul.addr %s152, 8
        %s154 = scalar_lea.vmem [#allocation2], %s153
        %p155 = pneg %p62
        %p156 = pneg %p59
        %p157 = pneg %p92
        %p158 = pneg %p89
        %s159 = sand.u32 %s79, 1
        %s160 = scalar_lea.sflag [#allocation4], %s159
        %s161 = sand.u32 %s79, 1
        %s162 = smul.addr %s161, 16
        %s163 = scalar_lea.vmem [#allocation5], %s162
        %s164 = smul.u32 2, %s24
        %s165 = smul.u32 2, %s24
        %v166 = vld [vmem:[%s145] sm:$0xff]
        %v168 = vrot.slane %v166, 4
        %170 = vrot.lane.b32.xlu0 %v166, 112
        %v171 = vpop.permute.xlu0 %170
        %v172 = vrot.slane %v171, 4
        %174 = vrot.lane.b32.xlu0 %v166, 96
        %v175 = vpop.permute.xlu0 %174
        %v176 = vrot.slane %v175, 4
        %178 = vrot.lane.b32.xlu0 %v166, 80
        %v179 = vpop.permute.xlu0 %178
        %v180 = vrot.slane %v179, 4
        %182 = vrot.lane.b32.xlu0 %v166, 64
        %v183 = vpop.permute.xlu0 %182
        %v184 = vrot.slane %v183, 4
        %186 = vrot.lane.b32.xlu0 %v166, 48
        %v187 = vpop.permute.xlu0 %186
        %v188 = vrot.slane %v187, 4
        %190 = vrot.lane.b32.xlu0 %v166, 32
        %v191 = vpop.permute.xlu0 %190
        %v192 = vrot.slane %v191, 4
        %194 = vrot.lane.b32.xlu0 %v166, 16
        %v195 = vpop.permute.xlu0 %194
        %v196 = vrot.slane %v195, 4
        %v205 = vcombine.low %v166, %v175
        %v207 = vunpack.c.l.s4 1983009808
        %v208 = vunpack.c.0.s8 %v207
        %v209 = vlaneseq
        %v210 = vshrl.u32 %v209, 7
        %v211 = vsub.s32 %v208, %v210
        %v212 = vrot.slane %v205, %v211
        %v213 = vcombine.low %v171, %v179
        %v215 = vunpack.c.l.s4 1983009808
        %v216 = vunpack.c.0.s8 %v215
        %v217 = vlaneseq
        %v218 = vshrl.u32 %v217, 7
        %v219 = vsub.s32 %v216, %v218
        %v220 = vrot.slane %v213, %v219
        %v221 = vcombine.low %v212, %v220
        %v222 = vcombine.high %v212, %v220
        %v224 = vunpack.c.l.s4 1934713408
        %v225 = vunpack.c.0.s8 %v224
        %v226 = vlaneseq
        %v227 = vshrl.u32 %v226, 7
        %v228 = vsub.s32 %v225, %v227
        %v229 = vrot.slane %v221, %v228
        %v231 = vunpack.c.l.s4 1934713408
        %v232 = vunpack.c.0.s8 %v231
        %v233 = vlaneseq
        %v234 = vshrl.u32 %v233, 7
        %v235 = vsub.s32 %v232, %v234
        %v236 = vrot.slane %v222, %v235
        %v237 = vcombine.high %v229, 0.0
        %v238 = vcombine.high %v236, 0.0
        %v239 = vcombine.low %v183, %v191
        %v241 = vunpack.c.l.s4 1983009808
        %v242 = vunpack.c.0.s8 %v241
        %v243 = vlaneseq
        %v244 = vshrl.u32 %v243, 7
        %v245 = vsub.s32 %v242, %v244
        %v246 = vrot.slane %v239, %v245
        %v247 = vcombine.low %v187, %v195
        %v249 = vunpack.c.l.s4 1983009808
        %v250 = vunpack.c.0.s8 %v249
        %v251 = vlaneseq
        %v252 = vshrl.u32 %v251, 7
        %v253 = vsub.s32 %v250, %v252
        %v254 = vrot.slane %v247, %v253
        %v255 = vcombine.low %v246, %v254
        %v256 = vcombine.high %v246, %v254
        %v258 = vunpack.c.l.s4 1934713408
        %v259 = vunpack.c.0.s8 %v258
        %v260 = vlaneseq
        %v261 = vshrl.u32 %v260, 7
        %v262 = vsub.s32 %v259, %v261
        %v263 = vrot.slane %v255, %v262
        %v265 = vunpack.c.l.s4 1934713408
        %v266 = vunpack.c.0.s8 %v265
        %v267 = vlaneseq
        %v268 = vshrl.u32 %v267, 7
        %v269 = vsub.s32 %v266, %v268
        %v270 = vrot.slane %v256, %v269
        %v271 = vcombine.high %v263, 0.0
        %v272 = vcombine.high %v270, 0.0
        %v273 = vcombine.low %v168, %v176
        %v275 = vunpack.c.l.s4 1983009808
        %v276 = vunpack.c.0.s8 %v275
        %v277 = vlaneseq
        %v278 = vshrl.u32 %v277, 7
        %v279 = vsub.s32 %v276, %v278
        %v280 = vrot.slane %v273, %v279
        %v281 = vcombine.low %v172, %v180
        %v283 = vunpack.c.l.s4 1983009808
        %v284 = vunpack.c.0.s8 %v283
        %v285 = vlaneseq
        %v286 = vshrl.u32 %v285, 7
        %v287 = vsub.s32 %v284, %v286
        %v288 = vrot.slane %v281, %v287
        %v289 = vcombine.low %v280, %v288
        %v290 = vcombine.high %v280, %v288
        %v292 = vunpack.c.l.s4 1934713408
        %v293 = vunpack.c.0.s8 %v292
        %v294 = vlaneseq
        %v295 = vshrl.u32 %v294, 7
        %v296 = vsub.s32 %v293, %v295
        %v297 = vrot.slane %v289, %v296
        %v299 = vunpack.c.l.s4 1934713408
        %v300 = vunpack.c.0.s8 %v299
        %v301 = vlaneseq
        %v302 = vshrl.u32 %v301, 7
        %v303 = vsub.s32 %v300, %v302
        %v304 = vrot.slane %v290, %v303
        %v305 = vcombine.high %v297, 0.0
        %v306 = vcombine.high %v304, 0.0
        %v307 = vcombine.low %v184, %v192
        %v309 = vunpack.c.l.s4 1983009808
        %v310 = vunpack.c.0.s8 %v309
        %v311 = vlaneseq
        %v312 = vshrl.u32 %v311, 7
        %v313 = vsub.s32 %v310, %v312
        %v314 = vrot.slane %v307, %v313
        %v315 = vcombine.low %v188, %v196
        %v317 = vunpack.c.l.s4 1983009808
        %v318 = vunpack.c.0.s8 %v317
        %v319 = vlaneseq
        %v320 = vshrl.u32 %v319, 7
        %v321 = vsub.s32 %v318, %v320
        %v322 = vrot.slane %v315, %v321
        %v323 = vcombine.low %v314, %v322
        %v324 = vcombine.high %v314, %v322
        %v326 = vunpack.c.l.s4 1934713408
        %v327 = vunpack.c.0.s8 %v326
        %v328 = vlaneseq
        %v329 = vshrl.u32 %v328, 7
        %v330 = vsub.s32 %v327, %v329
        %v331 = vrot.slane %v323, %v330
        %v333 = vunpack.c.l.s4 1934713408
        %v334 = vunpack.c.0.s8 %v333
        %v335 = vlaneseq
        %v336 = vshrl.u32 %v335, 7
        %v337 = vsub.s32 %v334, %v336
        %v338 = vrot.slane %v324, %v337
        %v339 = vcombine.high %v331, 0.0
        %v340 = vcombine.high %v338, 0.0
        %v341 = vcombine.low %v229, %v236
        %v343 = vunpack.c.l.s4 1983009808
        %v344 = vunpack.c.0.s8 %v343
        %v345 = vlaneseq
        %v346 = vshrl.u32 %v345, 7
        %v347 = vsub.s32 %v344, %v346
        %v348 = vrot.slane %v341, %v347
        %v349 = vcombine.low %v237, %v238
        %v351 = vunpack.c.l.s4 1983009808
        %v352 = vunpack.c.0.s8 %v351
        %v353 = vlaneseq
        %v354 = vshrl.u32 %v353, 7
        %v355 = vsub.s32 %v352, %v354
        %v356 = vrot.slane %v349, %v355
        %v357 = vcombine.low %v348, %v356
        %v358 = vcombine.high %v348, %v356
        %v360 = vunpack.c.l.s4 1934713408
        %v361 = vunpack.c.0.s8 %v360
        %v362 = vlaneseq
        %v363 = vshrl.u32 %v362, 7
        %v364 = vsub.s32 %v361, %v363
        %v365 = vrot.slane %v357, %v364
        %v367 = vunpack.c.l.s4 1934713408
        %v368 = vunpack.c.0.s8 %v367
        %v369 = vlaneseq
        %v370 = vshrl.u32 %v369, 7
        %v371 = vsub.s32 %v368, %v370
        %v372 = vrot.slane %v358, %v371
        %v373 = vcombine.high %v365, 0.0
        %v374 = vcombine.high %v372, 0.0
        %v375 = vcombine.low %v263, %v270
        %v377 = vunpack.c.l.s4 1983009808
        %v378 = vunpack.c.0.s8 %v377
        %v379 = vlaneseq
        %v380 = vshrl.u32 %v379, 7
        %v381 = vsub.s32 %v378, %v380
        %v382 = vrot.slane %v375, %v381
        %v383 = vcombine.low %v271, %v272
        %v385 = vunpack.c.l.s4 1983009808
        %v386 = vunpack.c.0.s8 %v385
        %v387 = vlaneseq
        %v388 = vshrl.u32 %v387, 7
        %v389 = vsub.s32 %v386, %v388
        %v390 = vrot.slane %v383, %v389
        %v391 = vcombine.low %v382, %v390
        %v392 = vcombine.high %v382, %v390
        %v394 = vunpack.c.l.s4 1934713408
        %v395 = vunpack.c.0.s8 %v394
        %v396 = vlaneseq
        %v397 = vshrl.u32 %v396, 7
        %v398 = vsub.s32 %v395, %v397
        %v399 = vrot.slane %v391, %v398
        %v401 = vunpack.c.l.s4 1934713408
        %v402 = vunpack.c.0.s8 %v401
        %v403 = vlaneseq
        %v404 = vshrl.u32 %v403, 7
        %v405 = vsub.s32 %v402, %v404
        %v406 = vrot.slane %v392, %v405
        %v407 = vcombine.high %v399, 0.0
        %v408 = vcombine.high %v406, 0.0
        %v409 = vcombine.low %v297, %v304
        %v411 = vunpack.c.l.s4 1983009808
        %v412 = vunpack.c.0.s8 %v411
        %v413 = vlaneseq
        %v414 = vshrl.u32 %v413, 7
        %v415 = vsub.s32 %v412, %v414
        %v416 = vrot.slane %v409, %v415
        %v417 = vcombine.low %v305, %v306
        %v419 = vunpack.c.l.s4 1983009808
        %v420 = vunpack.c.0.s8 %v419
        %v421 = vlaneseq
        %v422 = vshrl.u32 %v421, 7
        %v423 = vsub.s32 %v420, %v422
        %v424 = vrot.slane %v417, %v423
        %v425 = vcombine.low %v416, %v424
        %v426 = vcombine.high %v416, %v424
        %v428 = vunpack.c.l.s4 1934713408
        %v429 = vunpack.c.0.s8 %v428
        %v430 = vlaneseq
        %v431 = vshrl.u32 %v430, 7
        %v432 = vsub.s32 %v429, %v431
        %v433 = vrot.slane %v425, %v432
        %v435 = vunpack.c.l.s4 1934713408
        %v436 = vunpack.c.0.s8 %v435
        %v437 = vlaneseq
        %v438 = vshrl.u32 %v437, 7
        %v439 = vsub.s32 %v436, %v438
        %v440 = vrot.slane %v426, %v439
        %v441 = vcombine.high %v433, 0.0
        %v442 = vcombine.high %v440, 0.0
        %v443 = vcombine.low %v331, %v338
        %v445 = vunpack.c.l.s4 1983009808
        %v446 = vunpack.c.0.s8 %v445
        %v447 = vlaneseq
        %v448 = vshrl.u32 %v447, 7
        %v449 = vsub.s32 %v446, %v448
        %v450 = vrot.slane %v443, %v449
        %v451 = vcombine.low %v339, %v340
        %v453 = vunpack.c.l.s4 1983009808
        %v454 = vunpack.c.0.s8 %v453
        %v455 = vlaneseq
        %v456 = vshrl.u32 %v455, 7
        %v457 = vsub.s32 %v454, %v456
        %v458 = vrot.slane %v451, %v457
        %v459 = vcombine.low %v450, %v458
        %v460 = vcombine.high %v450, %v458
        %v462 = vunpack.c.l.s4 1934713408
        %v463 = vunpack.c.0.s8 %v462
        %v464 = vlaneseq
        %v465 = vshrl.u32 %v464, 7
        %v466 = vsub.s32 %v463, %v465
        %v467 = vrot.slane %v459, %v466
        %v469 = vunpack.c.l.s4 1934713408
        %v470 = vunpack.c.0.s8 %v469
        %v471 = vlaneseq
        %v472 = vshrl.u32 %v471, 7
        %v473 = vsub.s32 %v470, %v472
        %v474 = vrot.slane %v460, %v473
        %v475 = vcombine.high %v467, 0.0
        %v476 = vcombine.high %v474, 0.0
        %v477 = vcombine.low %v365, %v372
        %v479 = vunpack.c.l.s4 1983009808
        %v480 = vunpack.c.0.s8 %v479
        %v481 = vlaneseq
        %v482 = vshrl.u32 %v481, 7
        %v483 = vsub.s32 %v480, %v482
        %v484 = vrot.slane %v477, %v483
        %v485 = vcombine.low %v373, %v374
        %v487 = vunpack.c.l.s4 1983009808
        %v488 = vunpack.c.0.s8 %v487
        %v489 = vlaneseq
        %v490 = vshrl.u32 %v489, 7
        %v491 = vsub.s32 %v488, %v490
        %v492 = vrot.slane %v485, %v491
        %v493 = vcombine.low %v484, %v492
        %v494 = vcombine.high %v484, %v492
        %v496 = vunpack.c.l.s4 1934713408
        %v497 = vunpack.c.0.s8 %v496
        %v498 = vlaneseq
        %v499 = vshrl.u32 %v498, 7
        %v500 = vsub.s32 %v497, %v499
        %v501 = vrot.slane %v493, %v500
        %v503 = vunpack.c.l.s4 1934713408
        %v504 = vunpack.c.0.s8 %v503
        %v505 = vlaneseq
        %v506 = vshrl.u32 %v505, 7
        %v507 = vsub.s32 %v504, %v506
        %v508 = vrot.slane %v494, %v507
        %v509 = vcombine.high %v501, 0.0
        %v510 = vcombine.high %v508, 0.0
        %v511 = vcombine.low %v399, %v406
        %v513 = vunpack.c.l.s4 1983009808
        %v514 = vunpack.c.0.s8 %v513
        %v515 = vlaneseq
        %v516 = vshrl.u32 %v515, 7
        %v517 = vsub.s32 %v514, %v516
        %v518 = vrot.slane %v511, %v517
        %v519 = vcombine.low %v407, %v408
        %v521 = vunpack.c.l.s4 1983009808
        %v522 = vunpack.c.0.s8 %v521
        %v523 = vlaneseq
        %v524 = vshrl.u32 %v523, 7
        %v525 = vsub.s32 %v522, %v524
        %v526 = vrot.slane %v519, %v525
        %v527 = vcombine.low %v518, %v526
        %v528 = vcombine.high %v518, %v526
        %v530 = vunpack.c.l.s4 1934713408
        %v531 = vunpack.c.0.s8 %v530
        %v532 = vlaneseq
        %v533 = vshrl.u32 %v532, 7
        %v534 = vsub.s32 %v531, %v533
        %v535 = vrot.slane %v527, %v534
        %v537 = vunpack.c.l.s4 1934713408
        %v538 = vunpack.c.0.s8 %v537
        %v539 = vlaneseq
        %v540 = vshrl.u32 %v539, 7
        %v541 = vsub.s32 %v538, %v540
        %v542 = vrot.slane %v528, %v541
        %v543 = vcombine.high %v535, 0.0
        %v544 = vcombine.high %v542, 0.0
        %v545 = vcombine.low %v433, %v440
        %v547 = vunpack.c.l.s4 1983009808
        %v548 = vunpack.c.0.s8 %v547
        %v549 = vlaneseq
        %v550 = vshrl.u32 %v549, 7
        %v551 = vsub.s32 %v548, %v550
        %v552 = vrot.slane %v545, %v551
        %v553 = vcombine.low %v441, %v442
        %v555 = vunpack.c.l.s4 1983009808
        %v556 = vunpack.c.0.s8 %v555
        %v557 = vlaneseq
        %v558 = vshrl.u32 %v557, 7
        %v559 = vsub.s32 %v556, %v558
        %v560 = vrot.slane %v553, %v559
        %v561 = vcombine.low %v552, %v560
        %v562 = vcombine.high %v552, %v560
        %v564 = vunpack.c.l.s4 1934713408
        %v565 = vunpack.c.0.s8 %v564
        %v566 = vlaneseq
        %v567 = vshrl.u32 %v566, 7
        %v568 = vsub.s32 %v565, %v567
        %v569 = vrot.slane %v561, %v568
        %v571 = vunpack.c.l.s4 1934713408
        %v572 = vunpack.c.0.s8 %v571
        %v573 = vlaneseq
        %v574 = vshrl.u32 %v573, 7
        %v575 = vsub.s32 %v572, %v574
        %v576 = vrot.slane %v562, %v575
        %v577 = vcombine.high %v569, 0.0
        %v578 = vcombine.high %v576, 0.0
        %v579 = vcombine.low %v467, %v474
        %v581 = vunpack.c.l.s4 1983009808
        %v582 = vunpack.c.0.s8 %v581
        %v583 = vlaneseq
        %v584 = vshrl.u32 %v583, 7
        %v585 = vsub.s32 %v582, %v584
        %v586 = vrot.slane %v579, %v585
        %v587 = vcombine.low %v475, %v476
        %v589 = vunpack.c.l.s4 1983009808
        %v590 = vunpack.c.0.s8 %v589
        %v591 = vlaneseq
        %v592 = vshrl.u32 %v591, 7
        %v593 = vsub.s32 %v590, %v592
        %v594 = vrot.slane %v587, %v593
        %v595 = vcombine.low %v586, %v594
        %v596 = vcombine.high %v586, %v594
        %v598 = vunpack.c.l.s4 1934713408
        %v599 = vunpack.c.0.s8 %v598
        %v600 = vlaneseq
        %v601 = vshrl.u32 %v600, 7
        %v602 = vsub.s32 %v599, %v601
        %v603 = vrot.slane %v595, %v602
        %v605 = vunpack.c.l.s4 1934713408
        %v606 = vunpack.c.0.s8 %v605
        %v607 = vlaneseq
        %v608 = vshrl.u32 %v607, 7
        %v609 = vsub.s32 %v606, %v608
        %v610 = vrot.slane %v596, %v609
        %v611 = vcombine.high %v603, 0.0
        %v612 = vcombine.high %v610, 0.0
        %v617 = vcombine.low %v501, %v535
        %v618 = vcombine.low %v569, %v603
        %v625 = vcombine.low %v509, %v543
        %v626 = vcombine.low %v577, %v611
        %627 = vrot.lane.b32.xlu0 %v625, 16
        %v628 = vpop.permute.xlu0 %627
        %629 = vrot.lane.b32.xlu0 %v626, 16
        %v630 = vpop.permute.xlu0 %629
        %v637 = vcombine.low %v508, %v542
        %v638 = vcombine.low %v576, %v610
        %639 = vrot.lane.b32.xlu0 %v637, 32
        %v640 = vpop.permute.xlu0 %639
        %641 = vrot.lane.b32.xlu0 %v638, 32
        %v642 = vpop.permute.xlu0 %641
        %v649 = vcombine.low %v510, %v544
        %v650 = vcombine.low %v578, %v612
        %651 = vrot.lane.b32.xlu0 %v649, 48
        %v652 = vpop.permute.xlu0 %651
        %653 = vrot.lane.b32.xlu0 %v650, 48
        %v654 = vpop.permute.xlu0 %653
        %vm657 = vcmask 130048
        %v658 = vsel %vm657, %v617, %v628
        %v659 = vsel %vm657, %v618, %v630
        %vm660 = vcmask 261120
        %v661 = vsel %vm660, %v658, %v640
        %v662 = vsel %vm660, %v659, %v642
        %vm663 = vcmask 392192
        %v664 = vsel %vm663, %v661, %v652
        %v665 = vsel %vm663, %v662, %v654
        %vm666 = vcmask 523264
        %667 = vst.msk [vmem:[%s163] sm:$0xff] %vm666, %v664
        %668 = vst.msk [vmem:[%s163 + $0x8] sm:$0xff] %vm666, %v665
        %s669 = sand.u32 %s79, 1
        %s670 = scalar_lea.sflag [#allocation4], %s669
        %s671 = sand.u32 %s79, 1
        %s672 = smul.addr %s671, 16
        %s673 = scalar_lea.vmem [#allocation5], %s672
        // Predicated region
        $region29: #{tpu_custom_call.1} parent=23 // pred_check
          %p674 = pneg %p89
        $region30: #{tpu_custom_call.1} parent=23 // pred_check_branch
          %676 = sbr.rel (%p674) target = $region32
        $region31: #{tpu_custom_call.1} parent=23 // pred_region
          %s677 = smul.u32 2, %s24
          %s679 = ssub.s32 256, 256
          %680 = vsyncadd %s670, %s679
          %s681 = sadd.s32 %s25, %s677
          %s682 = smul.addr %s23, 2
          %s683 = sadd.s32 %s681, %s682
          %s684 = smul.addr %s683, 128
          %s685 = scalar_lea.hbm %s1, %s684
          %s686 = sshll.u32 %s673, 4
          %s687 = int_to_ptr.vmem [resolvable:$true] %s686
          %692 = dma.vmem_to_hbm [thread:$0]  %s687, 256, %s685, %s670, 128, 128, 8
        $region32: #{tpu_custom_call.1} parent=23 // pred_fallthru
          _
      $region24: #{tpu_custom_call.1} parent=5 // pred_fallthru
        _
      %p693 = scmp.le.s32.totalorder 2, %s13
      // Predicated region
      $region33: #{tpu_custom_call.1} parent=5 // pred_check
        %p694 = pneg %p693
      $region34: #{tpu_custom_call.1} parent=5 // pred_check_branch
        %696 = sbr.rel (%p694) target = $region36
      $region35: #{tpu_custom_call.1} parent=5 // pred_region
        %s697 = ssub.s32 %s13, 2
        // Predicated region
        $region37: #{tpu_custom_call.1} parent=35 // pred_check
          %p698 = pneg %p95
        $region38: #{tpu_custom_call.1} parent=35 // pred_check_branch
          %700 = sbr.rel (%p698) target = $region40
        $region39: #{tpu_custom_call.1} parent=35 // pred_region
          %s701 = sand.u32 %s80, 1
          %s702 = scalar_lea.sflag [#allocation4], %s701
          %s703 = sand.u32 %s80, 1
          %s704 = smul.addr %s703, 16
          %s705 = scalar_lea.vmem [#allocation5], %s704
          %706 = dma.done %s702, 256
        $region40: #{tpu_custom_call.1} parent=35 // pred_fallthru
          _
      $region36: #{tpu_custom_call.1} parent=5 // pred_fallthru
        _
    $region6: #{tpu_custom_call.1} parent=1 // loop_footer
      %s17 = sadd.s32 1, %s13
    $region7: #{tpu_custom_call.1} parent=1 // loop_footer_branch
      %12 = sbr.rel target = $region3
    $region8: #{tpu_custom_call.1} parent=1 // loop_exit
      _
    %707 = vsyncpa [#allocation3], 1
    %s708 = scalar_lea.sflag [#allocation3], 1
    %709 = vsyncpa %s708, 1
    %710 = vsyncpa [#allocation4], 1
    %s711 = scalar_lea.sflag [#allocation4], 1
    %712 = vsyncpa %s711, 1

// kernel: tpu_custom_call.1
$region0: #{tpu_custom_call.1}
  #allocation0 [shape = 'u32[]', space=smem, size = 0x4, offset = 0x4, fixed_abs, tag = 'smem constant byte address 0x4 - core index']
  #allocation1 [shape = 'u32[144,128]{1,0:T(1,128)}', space=vmem, size = 0x12000, scoped, tag = 'internal scratch']
  %s0 = inlined_call_operand.hbm [shape: f32[2,4,16,16], index: 0, kind: input, shape index: {}]
  %s1 = inlined_call_operand.hbm [shape: f32[2,16,4,16], index: 1, kind: output, shape index: {}]
  %s2 = sld [smem:[#allocation0]]
  $region41: #{tpu_custom_call.1} parent=0
    _
  %s4 = ssub.s32 1, %s2
  %s5 = scalar_select 0, %s4, %s2
  $region1: #{tpu_custom_call.1} parent=0
    #allocation2 [shape = 'u8[65536]{0}', space=vmem, size = 0x10000, scoped, tag = 'input window, operand 0']
    #allocation3 [shape = 's32[2]{0}', space=sflag, size = 0x8, scoped, tag = 'scoped memory for tpu_custom_call.1']
    #allocation4 [shape = 's32[2]{0}', space=sflag, size = 0x8, scoped, tag = 'scoped memory for tpu_custom_call.1']
    #allocation5 [shape = 'u8[65536]{0}', space=vmem, size = 0x10000, scoped, tag = 'output window, operand 0']
    %6 = vsyncpa [#allocation3], 0
    %s7 = scalar_lea.sflag [#allocation3], 1
    %8 = vsyncpa %s7, 0
    %9 = vsyncpa [#allocation4], 0
    %s10 = scalar_lea.sflag [#allocation4], 1
    %11 = vsyncpa %s10, 0
    loop: start=0, step=1, limit=4
    $region2: #{tpu_custom_call.1} parent=1 // loop_pre_header
      _
    $region3: #{tpu_custom_call.1} parent=1 // loop_header
      %s13 = sphi 0, %s17
      %p14 = scmp.ge.s32.totalorder %s13, 4
      %s20 = sphi 0, %s39
      %s21 = sphi 0, %s35
      %s22 = sphi 0, %s31
      %s23 = sphi 0, %s20
      %s24 = sphi 0, %s21
      %s25 = sphi 0, %s22
      %s26 = sphi 0, %s23
      %s27 = sphi 0, %s24
      %s28 = sphi 0, %s25
      %s46 = sphi 0, %s48
      %s49 = sphi 0, %s46
      %s50 = sphi 0, %s49
      %s66 = sphi 0, %s50
      %s76 = sphi 0, %s78
      %s79 = sphi 0, %s76
      %s80 = sphi 0, %s79
      %s96 = sphi 0, %s80
    $region4: #{tpu_custom_call.1} parent=1 // loop_header_branch
      %16 = sbr.rel (%p14) target = $region8
    $region5: #{tpu_custom_call.1} parent=1 // loop_body
      %s18 = ssub.s32 %s13, 1
      %s19 = ssub.s32 %s13, 2
      %s29 = sadd.s32 1, %s22
      %p30 = scmp.ge.s32.totalorder %s29, 1
      %s31 = scalar_select %p30, 0, %s29
      %s32 = sadd.s32 1, %s21
      %s33 = scalar_select %p30, %s32, %s21
      %p34 = scmp.ge.s32.totalorder %s33, 1
      %s35 = scalar_select %p34, 0, %s33
      %s36 = sadd.s32 1, %s20
      %s37 = scalar_select %p34, %s36, %s20
      %p38 = scmp.ge.s32.totalorder %s37, 2
      %s39 = scalar_select %p38, 0, %s37
      %s40 = ssub.s32 %s20, %s39
      %s41 = ssub.s32 %s22, %s31
      %s42 = sor.u32 %s40, %s41
      %s43 = ssub.s32 %s21, %s35
      %s44 = sor.u32 %s42, %s43
      %p45 = scmp.eq.s32.totalorder %s44, 0
      %s47 = sadd.s32 %s46, 1
      %s48 = scalar_select %p45, %s46, %s47
      %p51 = pneg %p45
      %p52 = scmp.eq.s32.totalorder %s13, 1
      %p53 = por %p51, %p52
      %p54 = scmp.ne.s32.totalorder %s46, %s49
      %p55 = scmp.eq.s32.totalorder %s13, 0
      %p56 = por %p54, %p55
      %p57 = scmp.ne.s32.totalorder %s46, %s49
      %p58 = scmp.eq.s32.totalorder %s18, 1
      %p59 = por %p57, %p58
      %p60 = scmp.ne.s32.totalorder %s49, %s50
      %p61 = scmp.eq.s32.totalorder %s18, 0
      %p62 = por %p60, %p61
      %p63 = scmp.ne.s32.totalorder %s49, %s50
      %p64 = scmp.eq.s32.totalorder %s19, 1
      %p65 = por %p63, %p64
      %p67 = scmp.ne.s32.totalorder %s50, %s66
      %p68 = scmp.eq.s32.totalorder %s19, 0
      %p69 = por %p67, %p68
      %s70 = ssub.s32 %s20, %s39
      %s71 = ssub.s32 %s21, %s35
      %s72 = sor.u32 %s70, %s71
      %s73 = ssub.s32 %s22, %s31
      %s74 = sor.u32 %s72, %s73
      %p75 = scmp.eq.s32.totalorder %s74, 0
      %s77 = sadd.s32 %s76, 1
      %s78 = scalar_select %p75, %s76, %s77
      %p81 = pneg %p75
      %p82 = scmp.eq.s32.totalorder %s13, 1
      %p83 = por %p81, %p82
      %p84 = scmp.ne.s32.totalorder %s76, %s79
      %p85 = scmp.eq.s32.totalorder %s13, 0
      %p86 = por %p84, %p85
      %p87 = scmp.ne.s32.totalorder %s76, %s79
      %p88 = scmp.eq.s32.totalorder %s18, 1
      %p89 = por %p87, %p88
      %p90 = scmp.ne.s32.totalorder %s79, %s80
      %p91 = scmp.eq.s32.totalorder %s18, 0
      %p92 = por %p90, %p91
      %p93 = scmp.ne.s32.totalorder %s79, %s80
      %p94 = scmp.eq.s32.totalorder %s19, 1
      %p95 = por %p93, %p94
      %p97 = scmp.ne.s32.totalorder %s80, %s96
      %p98 = scmp.eq.s32.totalorder %s19, 0
      %p99 = por %p97, %p98
      %p100 = scmp.le.s32.totalorder 1, %s13
      %p101 = scmp.lt.s32.totalorder %s13, 3
      %p102 = pnand %p100, %p101
      %p103 = pneg %p102
      // Predicated region
      $region9: #{tpu_custom_call.1} parent=5 // pred_check
        _
      $region10: #{tpu_custom_call.1} parent=5 // pred_check_branch
        %105 = sbr.rel (%p102) target = $region12
      $region11: #{tpu_custom_call.1} parent=5 // pred_region
        %s106 = ssub.s32 %s13, 1
      $region12: #{tpu_custom_call.1} parent=5 // pred_fallthru
        _
      %p107 = scmp.lt.s32.totalorder %s13, 2
      // Predicated region
      $region13: #{tpu_custom_call.1} parent=5 // pred_check
        %p108 = pneg %p107
      $region14: #{tpu_custom_call.1} parent=5 // pred_check_branch
        %110 = sbr.rel (%p108) target = $region16
      $region15: #{tpu_custom_call.1} parent=5 // pred_region
        // Predicated region
        $region17: #{tpu_custom_call.1} parent=15 // pred_check
          %p111 = pneg %p56
        $region18: #{tpu_custom_call.1} parent=15 // pred_check_branch
          %113 = sbr.rel (%p111) target = $region20
        $region19: #{tpu_custom_call.1} parent=15 // pred_region
          %s114 = sand.u32 %s46, 1
          %s115 = scalar_lea.sflag [#allocation3], %s114
          %s116 = sand.u32 %s46, 1
          %s117 = smul.addr %s116, 64
          %s118 = scalar_lea.vmem [#allocation2], %s117
          %s119 = smul.u32 4, %s22
          %s120 = smul.u32 2, %s21
          %s122 = ssub.s32 1024, 1024
          %123 = vsyncadd %s115, %s122
          %s124 = smul.addr %s119, 2
          %s125 = sadd.s32 %s120, %s124
          %s126 = smul.addr %s20, 8
          %s127 = sadd.s32 %s125, %s126
          %s128 = smul.addr %s127, 128
          %s129 = scalar_lea.hbm %s0, %s128
          %s130 = sshll.u32 %s118, 4
          %s131 = int_to_ptr.vmem [resolvable:$true] %s130
          %136 = dma.hbm_to_vmem [thread:$0]  %s129, 1024, %s131, %s115, 128, 128, 8
        $region20: #{tpu_custom_call.1} parent=15 // pred_fallthru
          _
      $region16: #{tpu_custom_call.1} parent=5 // pred_fallthru
        _
      %p137 = scmp.le.s32.totalorder 1, %s13
      %p138 = scmp.lt.s32.totalorder %s13, 3
      %p139 = pnand %p137, %p138
      %p140 = pneg %p139
      // Predicated region
      $region21: #{tpu_custom_call.1} parent=5 // pred_check
        _
      $region22: #{tpu_custom_call.1} parent=5 // pred_check_branch
        %142 = sbr.rel (%p139) target = $region24
      $region23: #{tpu_custom_call.1} parent=5 // pred_region
        %s143 = ssub.s32 %s13, 1
        %s144 = sand.u32 %s49, 1
        %s145 = scalar_lea.sflag [#allocation3], %s144
        %s146 = sand.u32 %s49, 1
        %s147 = smul.addr %s146, 64
        %s148 = scalar_lea.vmem [#allocation2], %s147
        // Predicated region
        $region25: #{tpu_custom_call.1} parent=23 // pred_check
          %p149 = pneg %p62
        $region26: #{tpu_custom_call.1} parent=23 // pred_check_branch
          %151 = sbr.rel (%p149) target = $region28
        $region27: #{tpu_custom_call.1} parent=23 // pred_region
          %152 = dma.done %s145, 1024
        $region28: #{tpu_custom_call.1} parent=23 // pred_fallthru
          _
        %s153 = sand.u32 %s49, 1
        %s154 = scalar_lea.sflag [#allocation3], %s153
        %s155 = sand.u32 %s49, 1
        %s156 = smul.addr %s155, 64
        %s157 = scalar_lea.vmem [#allocation2], %s156
        %p158 = pneg %p62
        %p159 = pneg %p59
        %p160 = pneg %p92
        %p161 = pneg %p89
        %s162 = sand.u32 %s79, 1
        %s163 = scalar_lea.sflag [#allocation4], %s162
        %s164 = sand.u32 %s79, 1
        %s165 = smul.addr %s164, 64
        %s166 = scalar_lea.vmem [#allocation5], %s165
        %s167 = smul.u32 4, %s25
        %s168 = smul.u32 2, %s24
        %s169 = smul.u32 16, %s24
        %v170 = vld [vmem:[%s148] sm:$0xff]
        %v171 = vld [vmem:[%s148 + $0x8] sm:$0xff]
        %v172 = vld [vmem:[%s148 + $0x10] sm:$0xff]
        %v173 = vld [vmem:[%s148 + $0x18] sm:$0xff]
        %v174 = vld [vmem:[%s148 + $0x20] sm:$0xff]
        %v175 = vld [vmem:[%s148 + $0x28] sm:$0xff]
        %v176 = vld [vmem:[%s148 + $0x30] sm:$0xff]
        %v177 = vld [vmem:[%s148 + $0x38] sm:$0xff]
        %v178 = vcombine.low %v170, %v174
        %v179 = vcombine.high %v170, %v174
        %v181 = vunpack.c.l.s4 1983009808
        %v182 = vunpack.c.0.s8 %v181
        %v183 = vlaneseq
        %v184 = vshrl.u32 %v183, 7
        %v185 = vsub.s32 %v182, %v184
        %v186 = vrot.slane %v178, %v185
        %v188 = vunpack.c.l.s4 1983009808
        %v189 = vunpack.c.0.s8 %v188
        %v190 = vlaneseq
        %v191 = vshrl.u32 %v190, 7
        %v192 = vsub.s32 %v189, %v191
        %v193 = vrot.slane %v179, %v192
        %v194 = vcombine.low %v172, %v176
        %v195 = vcombine.high %v172, %v176
        %v197 = vunpack.c.l.s4 1983009808
        %v198 = vunpack.c.0.s8 %v197
        %v199 = vlaneseq
        %v200 = vshrl.u32 %v199, 7
        %v201 = vsub.s32 %v198, %v200
        %v202 = vrot.slane %v194, %v201
        %v204 = vunpack.c.l.s4 1983009808
        %v205 = vunpack.c.0.s8 %v204
        %v206 = vlaneseq
        %v207 = vshrl.u32 %v206, 7
        %v208 = vsub.s32 %v205, %v207
        %v209 = vrot.slane %v195, %v208
        %v210 = vcombine.low %v186, %v202
        %v211 = vcombine.high %v186, %v202
        %v213 = vunpack.c.l.s4 1934713408
        %v214 = vunpack.c.0.s8 %v213
        %v215 = vlaneseq
        %v216 = vshrl.u32 %v215, 7
        %v217 = vsub.s32 %v214, %v216
        %v218 = vrot.slane %v210, %v217
        %v220 = vunpack.c.l.s4 1934713408
        %v221 = vunpack.c.0.s8 %v220
        %v222 = vlaneseq
        %v223 = vshrl.u32 %v222, 7
        %v224 = vsub.s32 %v221, %v223
        %v225 = vrot.slane %v211, %v224
        %v226 = vcombine.low %v193, %v209
        %v227 = vcombine.high %v193, %v209
        %v229 = vunpack.c.l.s4 1934713408
        %v230 = vunpack.c.0.s8 %v229
        %v231 = vlaneseq
        %v232 = vshrl.u32 %v231, 7
        %v233 = vsub.s32 %v230, %v232
        %v234 = vrot.slane %v226, %v233
        %v236 = vunpack.c.l.s4 1934713408
        %v237 = vunpack.c.0.s8 %v236
        %v238 = vlaneseq
        %v239 = vshrl.u32 %v238, 7
        %v240 = vsub.s32 %v237, %v239
        %v241 = vrot.slane %v227, %v240
        %v242 = vcombine.high %v218, 0.0
        %v243 = vcombine.high %v225, 0.0
        %v244 = vcombine.high %v234, 0.0
        %v245 = vcombine.high %v241, 0.0
        %v246 = vcombine.low %v171, %v175
        %v247 = vcombine.high %v171, %v175
        %v249 = vunpack.c.l.s4 1983009808
        %v250 = vunpack.c.0.s8 %v249
        %v251 = vlaneseq
        %v252 = vshrl.u32 %v251, 7
        %v253 = vsub.s32 %v250, %v252
        %v254 = vrot.slane %v246, %v253
        %v256 = vunpack.c.l.s4 1983009808
        %v257 = vunpack.c.0.s8 %v256
        %v258 = vlaneseq
        %v259 = vshrl.u32 %v258, 7
        %v260 = vsub.s32 %v257, %v259
        %v261 = vrot.slane %v247, %v260
        %v262 = vcombine.low %v173, %v177
        %v263 = vcombine.high %v173, %v177
        %v265 = vunpack.c.l.s4 1983009808
        %v266 = vunpack.c.0.s8 %v265
        %v267 = vlaneseq
        %v268 = vshrl.u32 %v267, 7
        %v269 = vsub.s32 %v266, %v268
        %v270 = vrot.slane %v262, %v269
        %v272 = vunpack.c.l.s4 1983009808
        %v273 = vunpack.c.0.s8 %v272
        %v274 = vlaneseq
        %v275 = vshrl.u32 %v274, 7
        %v276 = vsub.s32 %v273, %v275
        %v277 = vrot.slane %v263, %v276
        %v278 = vcombine.low %v254, %v270
        %v279 = vcombine.high %v254, %v270
        %v281 = vunpack.c.l.s4 1934713408
        %v282 = vunpack.c.0.s8 %v281
        %v283 = vlaneseq
        %v284 = vshrl.u32 %v283, 7
        %v285 = vsub.s32 %v282, %v284
        %v286 = vrot.slane %v278, %v285
        %v288 = vunpack.c.l.s4 1934713408
        %v289 = vunpack.c.0.s8 %v288
        %v290 = vlaneseq
        %v291 = vshrl.u32 %v290, 7
        %v292 = vsub.s32 %v289, %v291
        %v293 = vrot.slane %v279, %v292
        %v294 = vcombine.low %v261, %v277
        %v295 = vcombine.high %v261, %v277
        %v297 = vunpack.c.l.s4 1934713408
        %v298 = vunpack.c.0.s8 %v297
        %v299 = vlaneseq
        %v300 = vshrl.u32 %v299, 7
        %v301 = vsub.s32 %v298, %v300
        %v302 = vrot.slane %v294, %v301
        %v304 = vunpack.c.l.s4 1934713408
        %v305 = vunpack.c.0.s8 %v304
        %v306 = vlaneseq
        %v307 = vshrl.u32 %v306, 7
        %v308 = vsub.s32 %v305, %v307
        %v309 = vrot.slane %v295, %v308
        %v310 = vcombine.high %v286, 0.0
        %v311 = vcombine.high %v293, 0.0
        %v312 = vcombine.high %v302, 0.0
        %v313 = vcombine.high %v309, 0.0
        %vm314 = vcmask 125952
        %315 = vst.msk [vmem:[%s166] sm:$0xf] %vm314, %v218
        %316 = vst.msk [vmem:[%s166 + $0x4] sm:$0xf] %vm314, %v242
        %317 = vst.msk [vmem:[%s166 + $0x8] sm:$0xf] %vm314, %v225
        %318 = vst.msk [vmem:[%s166 + $0xc] sm:$0xf] %vm314, %v243
        %319 = vst.msk [vmem:[%s166 + $0x10] sm:$0xf] %vm314, %v234
        %320 = vst.msk [vmem:[%s166 + $0x14] sm:$0xf] %vm314, %v244
        %321 = vst.msk [vmem:[%s166 + $0x18] sm:$0xf] %vm314, %v241
        %322 = vst.msk [vmem:[%s166 + $0x1c] sm:$0xf] %vm314, %v245
        %323 = vst.msk [vmem:[%s166 + $0x20] sm:$0xf] %vm314, %v286
        %324 = vst.msk [vmem:[%s166 + $0x24] sm:$0xf] %vm314, %v310
        %325 = vst.msk [vmem:[%s166 + $0x28] sm:$0xf] %vm314, %v293
        %326 = vst.msk [vmem:[%s166 + $0x2c] sm:$0xf] %vm314, %v311
        %327 = vst.msk [vmem:[%s166 + $0x30] sm:$0xf] %vm314, %v302
        %328 = vst.msk [vmem:[%s166 + $0x34] sm:$0xf] %vm314, %v312
        %329 = vst.msk [vmem:[%s166 + $0x38] sm:$0xf] %vm314, %v309
        %330 = vst.msk [vmem:[%s166 + $0x3c] sm:$0xf] %vm314, %v313
        %s331 = sand.u32 %s79, 1
        %s332 = scalar_lea.sflag [#allocation4], %s331
        %s333 = sand.u32 %s79, 1
        %s334 = smul.addr %s333, 64
        %s335 = scalar_lea.vmem [#allocation5], %s334
        // Predicated region
        $region29: #{tpu_custom_call.1} parent=23 // pred_check
          %p336 = pneg %p89
        $region30: #{tpu_custom_call.1} parent=23 // pred_check_branch
          %338 = sbr.rel (%p336) target = $region32
        $region31: #{tpu_custom_call.1} parent=23 // pred_region
          %s339 = smul.u32 16, %s24
          %s341 = ssub.s32 1024, 1024
          %342 = vsyncadd %s332, %s341
          %s343 = sadd.s32 %s25, %s339
          %s344 = smul.addr %s23, 16
          %s345 = sadd.s32 %s343, %s344
          %s346 = smul.addr %s345, 64
          %s347 = scalar_lea.hbm %s1, %s346
          %s348 = sshll.u32 %s335, 4
          %s349 = int_to_ptr.vmem [resolvable:$true] %s348
          %354 = dma.vmem_to_hbm [thread:$0]  %s349, 1024, %s347, %s332, 64, 64, 4
        $region32: #{tpu_custom_call.1} parent=23 // pred_fallthru
          _
      $region24: #{tpu_custom_call.1} parent=5 // pred_fallthru
        _
      %p355 = scmp.le.s32.totalorder 2, %s13
      // Predicated region
      $region33: #{tpu_custom_call.1} parent=5 // pred_check
        %p356 = pneg %p355
      $region34: #{tpu_custom_call.1} parent=5 // pred_check_branch
        %358 = sbr.rel (%p356) target = $region36
      $region35: #{tpu_custom_call.1} parent=5 // pred_region
        %s359 = ssub.s32 %s13, 2
        // Predicated region
        $region37: #{tpu_custom_call.1} parent=35 // pred_check
          %p360 = pneg %p95
        $region38: #{tpu_custom_call.1} parent=35 // pred_check_branch
          %362 = sbr.rel (%p360) target = $region40
        $region39: #{tpu_custom_call.1} parent=35 // pred_region
          %s363 = sand.u32 %s80, 1
          %s364 = scalar_lea.sflag [#allocation4], %s363
          %s365 = sand.u32 %s80, 1
          %s366 = smul.addr %s365, 64
          %s367 = scalar_lea.vmem [#allocation5], %s366
          %368 = dma.done %s364, 1024
        $region40: #{tpu_custom_call.1} parent=35 // pred_fallthru
          _
      $region36: #{tpu_custom_call.1} parent=5 // pred_fallthru
        _
    $region6: #{tpu_custom_call.1} parent=1 // loop_footer
      %s17 = sadd.s32 1, %s13
    $region7: #{tpu_custom_call.1} parent=1 // loop_footer_branch
      %12 = sbr.rel target = $region3
    $region8: #{tpu_custom_call.1} parent=1 // loop_exit
      _
    %369 = vsyncpa [#allocation3], 1
    %s370 = scalar_lea.sflag [#allocation3], 1
    %371 = vsyncpa %s370, 1
    %372 = vsyncpa [#allocation4], 1
    %s373 = scalar_lea.sflag [#allocation4], 1
    %374 = vsyncpa %s373, 1

</llo_original>
